<compile_context>
chip_gen: v5e
topology: v5e:2x2
jax: 0.10.0
libtpu: 0.0.40
codegen_flags: <defaults>
</compile_context>

<pallas_src>
import functools

import numpy as np
import jax
import jax.numpy as jnp
from jax import lax
from jax.experimental import pallas as pl
from jax.experimental.pallas import tpu as pltpu


# --------------------------------------------------------------------------
# Small helpers
# --------------------------------------------------------------------------
def _round_up(x, m):
    return (x + m - 1) // m * m


def _pick_div(dim, target, align):
    """Largest t <= target with dim % t == 0 and t % align == 0, else the full dim."""
    upper = min(target, dim)
    for t in range(upper, align - 1, -1):
        if dim % t == 0 and t % align == 0:
            return t
    return dim


# --------------------------------------------------------------------------
# Tiled linear (x @ W + b) kernel -- bf16 MXU, f32 accumulate
# --------------------------------------------------------------------------
def _linear_kernel(x_ref, w_ref, b_ref, o_ref, acc_ref):
    kk = pl.program_id(2)

    @pl.when(kk == 0)
    def _():
        acc_ref[...] = jnp.zeros(acc_ref.shape, acc_ref.dtype)

    acc_ref[...] += jnp.dot(
        x_ref[...], w_ref[...], preferred_element_type=jnp.float32
    )

    @pl.when(kk == pl.num_programs(2) - 1)
    def _():
        o_ref[...] = (acc_ref[...] + b_ref[...].astype(jnp.float32)).astype(o_ref.dtype)


def linear(x, w, b, *, out_dtype=jnp.float32, m_tile=256, n_tile=256, k_tile=512):
    """x: (S, Din), w: (Din, Dout), b: (1, Dout) -> (S, Dout) in out_dtype."""
    S, Din = x.shape
    Dout = w.shape[1]
    x = x.astype(jnp.bfloat16)
    w = w.astype(jnp.bfloat16)
    b = b.astype(jnp.float32)

    tm = _pick_div(S, m_tile, 8)
    tn = _pick_div(Dout, n_tile, 128)
    tk = _pick_div(Din, k_tile, 128)
    grid = (S // tm, Dout // tn, Din // tk)

    bytes_accessed = int(
        2 * S * Din * (Dout // tn)          # x re-read per output-column tile
        + 2 * Din * Dout * (S // tm)        # w re-read per output-row tile
        + jnp.dtype(out_dtype).itemsize * S * Dout
    )
    return pl.pallas_call(
        _linear_kernel,
        out_shape=jax.ShapeDtypeStruct((S, Dout), out_dtype),
        grid=grid,
        in_specs=[
            pl.BlockSpec((tm, tk), lambda i, j, kk: (i, kk)),
            pl.BlockSpec((tk, tn), lambda i, j, kk: (kk, j)),
            pl.BlockSpec((1, tn), lambda i, j, kk: (0, j)),
        ],
        out_specs=pl.BlockSpec((tm, tn), lambda i, j, kk: (i, j)),
        scratch_shapes=[pltpu.VMEM((tm, tn), jnp.float32)],
        compiler_params=pltpu.CompilerParams(
            dimension_semantics=("parallel", "parallel", "arbitrary"),
            vmem_limit_bytes=48 * 1024 * 1024,
        ),
        cost_estimate=pl.CostEstimate(
            flops=int(2 * S * Din * Dout),
            transcendentals=0,
            bytes_accessed=bytes_accessed,
        ),
    )(x, w, b)


# --------------------------------------------------------------------------
# Flash attention kernel: lane-dense (S, H*d) layout, in-kernel block-diagonal
# (segment) mask, skipped non-overlapping kv tiles via scalar prefetch.
# --------------------------------------------------------------------------
def _flash_attn_kernel(kv_lo_ref, kv_hi_ref, segq_ref, segk_ref,
                       q_ref, k_ref, v_ref, o_ref,
                       qs_sc, m_sc, l_sc, acc_sc, *, scale, hb, d):
    qi = pl.program_id(1)
    ki = pl.program_id(2)

    @pl.when(ki == 0)
    def _init():
        m_sc[...] = jnp.full(m_sc.shape, -jnp.inf, m_sc.dtype)
        l_sc[...] = jnp.zeros(l_sc.shape, l_sc.dtype)
        acc_sc[...] = jnp.zeros(acc_sc.shape, acc_sc.dtype)
        # Fold the softmax scale into q once per q tile (resident across ki).
        q = q_ref[...].astype(jnp.float32) * scale            # (tq, hb*d)
        for h in range(hb):
            qs_sc[h] = q[:, h * d:(h + 1) * d].astype(qs_sc.dtype)

    # Number of kv tiles that actually overlap this q tile's segment range.
    n_live = kv_hi_ref[qi] - kv_lo_ref[qi] + 1

    @pl.when(ki < n_live)
    def _compute():
        # Block-diagonal mask from per-token segment ids (shared across heads).
        mask = segq_ref[...] == segk_ref[...]                  # (tq,1)==(1,tk) -> (tq,tk)
        k = k_ref[...]                                         # (tk, hb*d) bf16
        v = v_ref[...]                                         # (tk, hb*d) bf16
        for h in range(hb):
            k_h = k[:, h * d:(h + 1) * d]                      # (tk, d)
            v_h = v[:, h * d:(h + 1) * d]                      # (tk, d)
            s = lax.dot_general(
                qs_sc[h], k_h,
                dimension_numbers=(((1,), (1,)), ((), ())),
                preferred_element_type=jnp.float32,
            )                                                  # (tq, tk)
            s = jnp.where(mask, s, -1e30)

            m_prev = m_sc[h]                                   # (tq, 1)
            m_new = jnp.maximum(m_prev, jnp.max(s, axis=-1, keepdims=True))
            alpha = jnp.exp(m_prev - m_new)
            p = jnp.exp(s - m_new)                             # un-normalized probs
            l_sc[h] = alpha * l_sc[h] + jnp.sum(p, axis=-1, keepdims=True)

            pv = lax.dot_general(
                p.astype(v_h.dtype), v_h,
                dimension_numbers=(((1,), (0,)), ((), ())),
                preferred_element_type=jnp.float32,
            )                                                  # (tq, d)
            acc_sc[h] = alpha * acc_sc[h] + pv
            m_sc[h] = m_new

    @pl.when(ki == pl.num_programs(2) - 1)
    def _finalize():
        for h in range(hb):
            inv_l = pl.reciprocal(l_sc[h], approx=True)        # EUP, deferred norm
            o_ref[:, h * d:(h + 1) * d] = (acc_sc[h] * inv_l).astype(o_ref.dtype)


def flash_attention(q, k, v, seg, *, scale, head_dim, tq, tk):
    """q, k, v: (S_pad, D) with D = H*head_dim; seg: (S_pad,) int32 segment ids.

    Padded rows must carry a segment id that never matches a real token.
    """
    S, D = q.shape
    d = head_dim
    H = D // d

    # Smallest head group whose lane width is a multiple of 128 (else all heads ->
    # full-width blocks, always legal).  Small hb keeps H//hb >= 2 for megacore.
    hb = H
    for cand in range(1, H + 1):
        if H % cand == 0 and (cand * d) % 128 == 0:
            hb = cand
            break

    nq = S // tq
    nk = S // tk

    seg = seg.astype(jnp.int32)
    seg_col = seg.reshape(S, 1)
    seg_row = seg.reshape(1, S)

    # Per-tile segment ranges -> contiguous range of kv tiles overlapping each q tile.
    qmin = seg.reshape(nq, tq).min(axis=1)
    qmax = seg.reshape(nq, tq).max(axis=1)
    kmin = seg.reshape(nk, tk).min(axis=1)
    kmax = seg.reshape(nk, tk).max(axis=1)
    overlap = (qmin[:, None] <= kmax[None, :]) & (kmin[None, :] <= qmax[:, None])
    kv_lo = jnp.argmax(overlap, axis=1).astype(jnp.int32)                 # first overlapping tile
    kv_hi = (nk - 1 - jnp.argmax(overlap[:, ::-1], axis=1)).astype(jnp.int32)  # last overlapping tile

    def kv_idx(qi, ki, lo_ref, hi_ref):
        # Clamp: dead steps revisit the last live block -> their DMA is elided.
        return jnp.minimum(lo_ref[qi] + ki, hi_ref[qi])

    kernel = functools.partial(_flash_attn_kernel, scale=float(scale), hb=hb, d=d)
    grid = (H // hb, nq, nk)
    return pl.pallas_call(
        kernel,
        out_shape=jax.ShapeDtypeStruct((S, D), q.dtype),
        grid_spec=pltpu.PrefetchScalarGridSpec(
            num_scalar_prefetch=2,
            grid=grid,
            in_specs=[
                pl.BlockSpec((tq, 1), lambda g, qi, ki, lo, hi: (qi, 0)),
                pl.BlockSpec((1, tk), lambda g, qi, ki, lo, hi: (0, kv_idx(qi, ki, lo, hi))),
                pl.BlockSpec((tq, hb * d), lambda g, qi, ki, lo, hi: (qi, g)),
                pl.BlockSpec((tk, hb * d), lambda g, qi, ki, lo, hi: (kv_idx(qi, ki, lo, hi), g)),
                pl.BlockSpec((tk, hb * d), lambda g, qi, ki, lo, hi: (kv_idx(qi, ki, lo, hi), g)),
            ],
            out_specs=pl.BlockSpec((tq, hb * d), lambda g, qi, ki, lo, hi: (qi, g)),
            scratch_shapes=[
                pltpu.VMEM((hb, tq, d), q.dtype),       # scaled q (per head)
                pltpu.VMEM((hb, tq, 1), jnp.float32),   # running max
                pltpu.VMEM((hb, tq, 1), jnp.float32),   # running denom
                pltpu.VMEM((hb, tq, d), jnp.float32),   # running output
            ],
        ),
        compiler_params=pltpu.CompilerParams(
            dimension_semantics=("parallel", "parallel", "arbitrary"),
            vmem_limit_bytes=48 * 1024 * 1024,
        ),
        cost_estimate=pl.CostEstimate(
            flops=int(4 * H * S * S * d),
            transcendentals=int(H * S * S),
            bytes_accessed=int(2 * S * D * 2 + 2 * S * D * 2 * nq),
        ),
    )(kv_lo, kv_hi, seg_col, seg_row, q, k, v)


# --------------------------------------------------------------------------
# Glue (plain JAX)
# --------------------------------------------------------------------------
def _rotary_blockwise(x, cos, sin):
    """RotaryPosEmbeddingMode.BLOCKWISE == rotate_half (NeoX style).

    x: (S, H, rd); cos, sin: (S, rd)
    """
    rd = x.shape[-1]
    x1, x2 = x[..., : rd // 2], x[..., rd // 2:]
    rot = jnp.concatenate([-x2, x1], axis=-1)
    return x * cos[:, None, :] + rot * sin[:, None, :]


def _segment_ids(cu_seqlens, length):
    # Rows beyond cu_seqlens[-1] (padding) automatically get id == num_segments,
    # which never matches a real token's segment.
    idx = jnp.arange(length, dtype=jnp.int32)
    return (jnp.searchsorted(cu_seqlens, idx, side="right") - 1).astype(jnp.int32)


def qwen2vl_attention(hidden_state, cu_seqlens, cos, sin, max_seqlen, params, num_heads):
    S, D = hidden_state.shape
    head_dim = D // num_heads
    rotary_dim = cos.shape[-1]
    del max_seqlen  # token count == hidden_state.shape[0] (cu_seqlens[-1] == S)

    # Choose flash tiles and pad the token axis once (pad rows are masked out).
    if S >= 512:
        tq, tk = 512, 256
    elif S >= 256:
        tq, tk = 256, 256
    elif S >= 128:
        tq, tk = 128, 128
    else:
        tq = tk = _round_up(S, 8)
    S_pad = _round_up(S, max(tq, tk))
    pad = S_pad - S
    hs = jnp.pad(hidden_state, ((0, pad), (0, 0))) if pad else hidden_state
    cosp = jnp.pad(cos, ((0, pad), (0, 0))) if pad else cos
    sinp = jnp.pad(sin, ((0, pad), (0, 0))) if pad else sin

    # qkv projection (tiled bf16 Pallas matmul), bf16 activations for attention.
    qkv = linear(hs, params["qkv_w"], params["qkv_b"], out_dtype=jnp.bfloat16)   # (S_pad, 3D)
    q, k, v = jnp.split(qkv, 3, axis=1)                                          # each (S_pad, D)

    # blockwise rotary on the leading rotary_dim channels, passthrough on the rest
    # TODO(synk): fuse rotary (pltpu.roll) into the flash-attention prologue / qkv
    # epilogue to save this extra elementwise HBM pass over q/k.
    def _rope(x):
        x3 = x.reshape(S_pad, num_heads, head_dim).astype(jnp.float32)
        x_rot = _rotary_blockwise(x3[..., :rotary_dim], cosp, sinp)
        x3 = jnp.concatenate([x_rot, x3[..., rotary_dim:]], axis=-1)
        return x3.reshape(S_pad, D).astype(jnp.bfloat16)

    q = _rope(q)
    k = _rope(k)

    seg = _segment_ids(cu_seqlens.astype(jnp.int32), S_pad)          # (S_pad,)
    scale = 1.0 / np.sqrt(head_dim)                                  # FusedSDPA scale=None default

    attn = flash_attention(q, k, v, seg, scale=scale, head_dim=head_dim, tq=tq, tk=tk)

    # output projection (tiled bf16 Pallas matmul), f32 result
    out = linear(attn, params["proj_w"], params["proj_b"], out_dtype=jnp.float32)
    return out[:S]


# pure-jnp f32 reference for a sanity check
def _reference(hidden_state, cu_seqlens, cos, sin, max_seqlen, params, num_heads):
    S, D = hidden_state.shape
    head_dim = D // num_heads
    qkv = hidden_state @ params["qkv_w"] + params["qkv_b"]
    q, k, v = jnp.split(qkv, 3, axis=1)
    q = q.reshape(S, num_heads, head_dim)
    k = k.reshape(S, num_heads, head_dim)
    v = v.reshape(S, num_heads, head_dim)
    rd = cos.shape[-1]
    q = jnp.concatenate([_rotary_blockwise(q[..., :rd], cos, sin), q[..., rd:]], axis=-1)
    k = jnp.concatenate([_rotary_blockwise(k[..., :rd], cos, sin), k[..., rd:]], axis=-1)
    qh, kh, vh = (jnp.transpose(t, (1, 0, 2)) for t in (q, k, v))
    seg = _segment_ids(cu_seqlens, S)
    allowed = seg[:, None] == seg[None, :]
    bias = jnp.where(allowed, 0.0, -1e30).astype(jnp.float32)
    s = jnp.einsum("hqd,hkd->hqk", qh, kh) / np.sqrt(head_dim) + bias[None]
    p = jax.nn.softmax(s, axis=-1)
    o = jnp.einsum("hqk,hkd->hqd", p, vh)
    o = jnp.transpose(o, (1, 0, 2)).reshape(S, D)
    return o @ params["proj_w"] + params["proj_b"]


# --------------------------------------------------------------------------
# Main
# --------------------------------------------------------------------------
if __name__ == "__main__":
    # Small synthetic config (process_group.size() == 1):
    #   embed_dim = 64, num_heads = 2, head_dim = 32, rotary_dim = 16 (partial rotary)
    S = 16
    embed_dim = 64
    num_heads = 2
    head_dim = embed_dim // num_heads
    rotary_dim = head_dim // 2
    max_seqlen = S

    key = jax.random.PRNGKey(0)
    k_h, k_qw, k_qb, k_pw, k_pb = jax.random.split(key, 5)

    hidden_state = jax.random.normal(k_h, (S, embed_dim), dtype=jnp.float32)

    params = {
        "qkv_w": 0.05 * jax.random.normal(k_qw, (embed_dim, 3 * embed_dim), dtype=jnp.float32),
        "qkv_b": 0.05 * jax.random.normal(k_qb, (1, 3 * embed_dim), dtype=jnp.float32),
        "proj_w": 0.05 * jax.random.normal(k_pw, (embed_dim, embed_dim), dtype=jnp.float32),
        "proj_b": 0.05 * jax.random.normal(k_pb, (1, embed_dim), dtype=jnp.float32),
    }

    # two packed sequences of length 8
    cu_seqlens = jnp.array([0, 8, 16], dtype=jnp.int32)

    # rotary cos/sin over rotary_dim channels (half-duplicated, rotate_half convention)
    pos = np.arange(S, dtype=np.float32)
    inv_freq = 1.0 / (10000.0 ** (np.arange(0, rotary_dim, 2, dtype=np.float32) / rotary_dim))
    freqs = np.outer(pos, inv_freq)                       # (S, rotary_dim/2)
    emb = np.concatenate([freqs, freqs], axis=-1)         # (S, rotary_dim)
    cos = jnp.asarray(np.cos(emb), dtype=jnp.float32)
    sin = jnp.asarray(np.sin(emb), dtype=jnp.float32)

    out = qwen2vl_attention(hidden_state, cu_seqlens, cos, sin, max_seqlen, params, num_heads)
    out = jax.block_until_ready(out)

    ref = _reference(hidden_state, cu_seqlens, cos, sin, max_seqlen, params, num_heads)
    # bf16 MXU operands -> slightly relaxed tolerance vs. the f32 reference.
    np.testing.assert_allclose(np.asarray(out), np.asarray(ref), rtol=2e-2, atol=2e-2)

    print("KERNEL_OK")
</pallas_src>

<mosaic_0001>
module attributes {stable_mosaic.version = 11 : i64} {
  func.func @_linear_kernel(%arg0: i32, %arg1: i32, %arg2: i32, %arg3: memref<16x64xbf16, #tpu.memory_space<vmem>>, %arg4: memref<64x192xbf16, #tpu.memory_space<vmem>>, %arg5: memref<1x192xf32, #tpu.memory_space<vmem>>, %arg6: memref<16x192xbf16, #tpu.memory_space<vmem>>, %arg7: memref<16x192xf32, #tpu.memory_space<vmem>>) attributes {dimension_semantics = [#tpu.dimension_semantics<parallel>, #tpu.dimension_semantics<parallel>, #tpu.dimension_semantics<arbitrary>], iteration_bounds = array<i64: 1, 1, 1>, scalar_prefetch = 0 : i64, scratch_operands = 1 : i64, tpu.core_type = #tpu.core_type<tc>, window_params = [{transform_indices = @transform_0, window_bounds = array<i64: 16, 64>}, {transform_indices = @transform_1, window_bounds = array<i64: 64, 192>}, {transform_indices = @transform_2, window_bounds = array<i64: 1, 192>}, {transform_indices = @transform_3, window_bounds = array<i64: 16, 192>}]} {
    %c0_i32 = arith.constant 0 : i32
    %0 = arith.cmpi eq, %arg2, %c0_i32 : i32
    %1 = arith.extui %0 : i1 to i32
    %c0_i32_0 = arith.constant 0 : i32
    %2 = arith.cmpi ne, %1, %c0_i32_0 : i32
    scf.if %2 {
      %cst_10 = arith.constant 0.000000e+00 : f32
      %12 = vector.broadcast %cst_10 : f32 to vector<16x192xf32>
      %c0_11 = arith.constant 0 : index
      %c0_12 = arith.constant 0 : index
      %13 = vector.load %arg7[%c0_11, %c0_12] : memref<16x192xf32, #tpu.memory_space<vmem>>, vector<16x192xf32>
      tpu.vector_store %arg7[%c0_11, %c0_12], %12 {strides = array<i32>} : memref<16x192xf32, #tpu.memory_space<vmem>>, vector<16x192xf32>,
    } else {
    }
    %c0 = arith.constant 0 : index
    %c0_1 = arith.constant 0 : index
    %3 = vector.load %arg7[%c0, %c0_1] : memref<16x192xf32, #tpu.memory_space<vmem>>, vector<16x192xf32>
    %c0_2 = arith.constant 0 : index
    %c0_3 = arith.constant 0 : index
    %4 = vector.load %arg3[%c0_2, %c0_3] : memref<16x64xbf16, #tpu.memory_space<vmem>>, vector<16x64xbf16>
    %c0_4 = arith.constant 0 : index
    %c0_5 = arith.constant 0 : index
    %5 = vector.load %arg4[%c0_4, %c0_5] : memref<64x192xbf16, #tpu.memory_space<vmem>>, vector<64x192xbf16>
    %cst = arith.constant dense<0.000000e+00> : vector<16x192xf32>
    %6 = tpu.matmul %4, %5, %cst {dimension_numbers = #tpu.dot_dimension_numbers<[1], [0], [0], [1], [0, 0, 1, 1], [], []>} : vector<16x64xbf16>, vector<64x192xbf16>, vector<16x192xf32> -> vector<16x192xf32>
    %7 = arith.addf %3, %6 : vector<16x192xf32>
    %c0_6 = arith.constant 0 : index
    %c0_7 = arith.constant 0 : index
    %8 = vector.load %arg7[%c0_6, %c0_7] : memref<16x192xf32, #tpu.memory_space<vmem>>, vector<16x192xf32>
    tpu.vector_store %arg7[%c0_6, %c0_7], %7 {strides = array<i32>} : memref<16x192xf32, #tpu.memory_space<vmem>>, vector<16x192xf32>,
    %c0_i32_8 = arith.constant 0 : i32
    %9 = arith.cmpi eq, %arg2, %c0_i32_8 : i32
    %10 = arith.extui %9 : i1 to i32
    %c0_i32_9 = arith.constant 0 : i32
    %11 = arith.cmpi ne, %10, %c0_i32_9 : i32
    scf.if %11 {
      %c0_10 = arith.constant 0 : index
      %c0_11 = arith.constant 0 : index
      %12 = vector.load %arg7[%c0_10, %c0_11] : memref<16x192xf32, #tpu.memory_space<vmem>>, vector<16x192xf32>
      %c0_12 = arith.constant 0 : index
      %c0_13 = arith.constant 0 : index
      %13 = vector.load %arg5[%c0_12, %c0_13] : memref<1x192xf32, #tpu.memory_space<vmem>>, vector<1x192xf32>
      %14 = vector.broadcast %13 : vector<1x192xf32> to vector<16x192xf32>
      %15 = arith.addf %12, %14 : vector<16x192xf32>
      %16 = arith.truncf %15 : vector<16x192xf32> to vector<16x192xbf16>
      %c0_14 = arith.constant 0 : index
      %c0_15 = arith.constant 0 : index
      %17 = vector.load %arg6[%c0_14, %c0_15] : memref<16x192xbf16, #tpu.memory_space<vmem>>, vector<16x192xbf16>
      tpu.vector_store %arg6[%c0_14, %c0_15], %16 {strides = array<i32>} : memref<16x192xbf16, #tpu.memory_space<vmem>>, vector<16x192xbf16>,
    } else {
    }
    return
  }
  func.func @transform_0(%arg0: i32, %arg1: i32, %arg2: i32) -> (i32, i32) {
    %c0_i32 = arith.constant 0 : i32
    return %arg0, %arg2 : i32, i32
  }
  func.func @transform_1(%arg0: i32, %arg1: i32, %arg2: i32) -> (i32, i32) {
    %c0_i32 = arith.constant 0 : i32
    return %arg2, %arg1 : i32, i32
  }
  func.func @transform_2(%arg0: i32, %arg1: i32, %arg2: i32) -> (i32, i32) {
    %c0_i32 = arith.constant 0 : i32
    %c0_i32_0 = arith.constant 0 : i32
    return %c0_i32, %arg1 : i32, i32
  }
  func.func @transform_3(%arg0: i32, %arg1: i32, %arg2: i32) -> (i32, i32) {
    %c0_i32 = arith.constant 0 : i32
    return %arg0, %arg1 : i32, i32
  }
}

</mosaic_0001>

<llo_original>
// kernel: tpu_custom_call.1
$region0: #{tpu_custom_call.1}
  #allocation0 [shape = 'u32[]', space=smem, size = 0x4, offset = 0x4, fixed_abs, tag = 'smem constant byte address 0x4 - core index']
  #allocation1 [shape = 'u32[72,128]{1,0:T(1,128)}', space=vmem, size = 0x9000, scoped, tag = 'internal scratch']
  #allocation2 [shape = 'f32[16,192]{1,0:T(8,128)}', space=vmem, size = 0x4000, scoped, tag = 'scratch operand']
  %s0 = inlined_call_operand.hbm [shape: bf16[16,64], index: 0, kind: input, shape index: {}]
  %s1 = inlined_call_operand.hbm [shape: bf16[64,192], index: 1, kind: input, shape index: {}]
  %s2 = inlined_call_operand.hbm [shape: f32[1,192], index: 2, kind: input, shape index: {}]
  %s3 = inlined_call_operand.hbm [shape: bf16[16,192], index: 3, kind: output, shape index: {}]
  %s4 = sld [smem:[#allocation0]]
  $region42: #{tpu_custom_call.1} parent=0
    _
  %s6 = ssub.s32 1, %s4
  %s7 = scalar_select 0, %s6, %s4
  $region1: #{tpu_custom_call.1} parent=0
    #allocation3 [shape = 'u8[4096]{0}', space=vmem, size = 0x1000, scoped, tag = 'input window, operand 0, single buffered']
    #allocation4 [shape = 's32[1]{0}', space=sflag, size = 0x4, scoped, tag = 'scoped memory for tpu_custom_call.1']
    #allocation5 [shape = 's32[1]{0}', space=sflag, size = 0x4, scoped, tag = 'scoped memory for tpu_custom_call.1']
    #allocation6 [shape = 'u8[32768]{0}', space=vmem, size = 0x8000, scoped, tag = 'input window, operand 1, single buffered']
    #allocation7 [shape = 's32[1]{0}', space=sflag, size = 0x4, scoped, tag = 'scoped memory for tpu_custom_call.1']
    #allocation8 [shape = 'u8[1024]{0}', space=vmem, size = 0x400, scoped, tag = 'input window, operand 2, single buffered']
    #allocation9 [shape = 'u8[8192]{0}', space=vmem, size = 0x2000, scoped, tag = 'output window, operand 0, single buffered']
    %8 = vsyncpa [#allocation4], 0
    %9 = vsyncpa [#allocation7], 0
    %10 = vsyncpa [#allocation5], 0
    // Predicated region
    $region2: #{tpu_custom_call.1} parent=1 // pred_check
      _
    $region3: #{tpu_custom_call.1} parent=1 // pred_check_branch
      %12 = sbr.rel (0) target = $region5
    $region4: #{tpu_custom_call.1} parent=1 // pred_region
      %14 = vsyncadd [#allocation4], 0
      %s15 = sshll.u32 %s0, 4
      %s16 = int_to_ptr.hbm [resolvable:$true] %s15
      %s17 = sshll.u32 [#allocation3], 4
      %s18 = int_to_ptr.vmem [resolvable:$true] %s17
      %23 = dma.hbm_to_vmem [thread:$0]  %s16, 128, %s18, [#allocation4], 64, 64, 4
    $region5: #{tpu_custom_call.1} parent=1 // pred_fallthru
      _
    // Predicated region
    $region6: #{tpu_custom_call.1} parent=1 // pred_check
      _
    $region7: #{tpu_custom_call.1} parent=1 // pred_check_branch
      %25 = sbr.rel (0) target = $region9
    $region8: #{tpu_custom_call.1} parent=1 // pred_region
      %27 = vsyncadd [#allocation7], 0
      %s28 = sshll.u32 %s1, 4
      %s29 = int_to_ptr.hbm [resolvable:$true] %s28
      %s30 = sshll.u32 [#allocation6], 4
      %s31 = int_to_ptr.vmem [resolvable:$true] %s30
      %36 = dma.hbm_to_vmem [thread:$0]  %s29, 1024, %s31, [#allocation7], 128, 128, 8
    $region9: #{tpu_custom_call.1} parent=1 // pred_fallthru
      _
    // Predicated region
    $region10: #{tpu_custom_call.1} parent=1 // pred_check
      _
    $region11: #{tpu_custom_call.1} parent=1 // pred_check_branch
      %38 = sbr.rel (0) target = $region13
    $region12: #{tpu_custom_call.1} parent=1 // pred_region
      %40 = vsyncadd [#allocation7], 0
      %s42 = sshll.u32 %s2, 4
      %s43 = int_to_ptr.hbm [resolvable:$true] %s42
      %s44 = sshll.u32 [#allocation8], 4
      %s45 = int_to_ptr.vmem [resolvable:$true] %s44
      %47 = dma.hbm_to_vmem [thread:$0]  %s43, 32, %s45, [#allocation7]
    $region13: #{tpu_custom_call.1} parent=1 // pred_fallthru
      _
    // Predicated region
    $region14: #{tpu_custom_call.1} parent=1 // pred_check
      _
    $region15: #{tpu_custom_call.1} parent=1 // pred_check_branch
      %49 = sbr.rel (0) target = $region17
    $region16: #{tpu_custom_call.1} parent=1 // pred_region
      %51 = dma.done [#allocation4], 128
    $region17: #{tpu_custom_call.1} parent=1 // pred_fallthru
      _
    // Predicated region
    $region18: #{tpu_custom_call.1} parent=1 // pred_check
      _
    $region19: #{tpu_custom_call.1} parent=1 // pred_check_branch
      %53 = sbr.rel (0) target = $region21
    $region20: #{tpu_custom_call.1} parent=1 // pred_region
      %55 = dma.done [#allocation7], 1024
    $region21: #{tpu_custom_call.1} parent=1 // pred_fallthru
      _
    // Predicated region
    $region22: #{tpu_custom_call.1} parent=1 // pred_check
      _
    $region23: #{tpu_custom_call.1} parent=1 // pred_check_branch
      %57 = sbr.rel (0) target = $region25
    $region24: #{tpu_custom_call.1} parent=1 // pred_region
      %59 = dma.done [#allocation7], 32
    $region25: #{tpu_custom_call.1} parent=1 // pred_fallthru
      _
    %p61 = scmp.eq.s32.totalorder 0, 0
    // Predicated region
    $region26: #{tpu_custom_call.1} parent=1 // pred_check
      %p62 = pneg %p61
    $region27: #{tpu_custom_call.1} parent=1 // pred_check_branch
      %64 = sbr.rel (%p62) target = $region29
    $region28: #{tpu_custom_call.1} parent=1 // pred_region
      %65 = vst [vmem:[#allocation2] sm:$0xff] 0.0
      %vm66 = vcmask 523264
      %67 = vst.msk [vmem:[#allocation2 + $0x8] sm:$0xff] %vm66, 0.0
      %68 = vst [vmem:[#allocation2 + $0x10] sm:$0xff] 0.0
      %69 = vst.msk [vmem:[#allocation2 + $0x18] sm:$0xff] %vm66, 0.0
    $region29: #{tpu_custom_call.1} parent=1 // pred_fallthru
      _
    %v70 = vld [vmem:[#allocation2] sm:$0xff]
    %v71 = vld [vmem:[#allocation2 + $0x8] sm:$0xff]
    %v72 = vld [vmem:[#allocation2 + $0x10] sm:$0xff]
    %v73 = vld [vmem:[#allocation2 + $0x18] sm:$0xff]
    %v74 = vld [vmem:[#allocation3] sm:$0xf]
    %v75 = vld [vmem:[#allocation3 + $0x4] sm:$0xf]
    %v76 = vld [vmem:[#allocation6] sm:$0xff]
    %v77 = vld [vmem:[#allocation6 + $0x8] sm:$0xff]
    %v78 = vld [vmem:[#allocation6 + $0x10] sm:$0xff]
    %v79 = vld [vmem:[#allocation6 + $0x18] sm:$0xff]
    %v80 = vld [vmem:[#allocation6 + $0x20] sm:$0xff]
    %v81 = vld [vmem:[#allocation6 + $0x28] sm:$0xff]
    %v82 = vld [vmem:[#allocation6 + $0x30] sm:$0xff]
    %v83 = vld [vmem:[#allocation6 + $0x38] sm:$0xff]
    %v86 = vunpack.c.l.b16 %v74
    %v87 = vunpack.c.l.b16 %v75
    %v88 = vpack.c.b16 %v87, %v86
    %v97 = vunpack.c.l.b16 %v76
    %v98 = vunpack.c.h.b16 %v76
    %v99 = vunpack.c.l.b16 %v77
    %v100 = vunpack.c.h.b16 %v77
    %v101 = vunpack.c.l.b16 %v78
    %v102 = vunpack.c.h.b16 %v78
    %v103 = vunpack.c.l.b16 %v79
    %v104 = vunpack.c.h.b16 %v79
    %v105 = vunpack.c.l.b16 %v80
    %v106 = vunpack.c.h.b16 %v80
    %v107 = vunpack.c.l.b16 %v81
    %v108 = vunpack.c.h.b16 %v81
    %v109 = vunpack.c.l.b16 %v82
    %v110 = vunpack.c.h.b16 %v82
    %v111 = vunpack.c.l.b16 %v83
    %v112 = vunpack.c.h.b16 %v83
    %v113 = vpack.c.b16 %v99, %v97
    %v114 = vpack.c.b16 %v100, %v98
    %v115 = vpack.c.b16 %v103, %v101
    %v116 = vpack.c.b16 %v104, %v102
    %v117 = vpack.c.b16 %v107, %v105
    %v118 = vpack.c.b16 %v108, %v106
    %v119 = vpack.c.b16 %v111, %v109
    %v120 = vpack.c.b16 %v112, %v110
    %vm129 = vcmask 523264
    %v131 = vsel %vm129, %v88, 0
    %133 = vmatpush.bf16.msra.mxu0 0
    %134 = vmatpush.bf16.msra.mxu0 0
    %135 = vmatpush.bf16.msra.mxu0 0
    %136 = vmatpush.bf16.msra.mxu0 0
    %137 = vmatpush.bf16.msra.mxu0 %v119
    %138 = vmatpush.bf16.msra.mxu0 %v117
    %139 = vmatpush.bf16.msra.mxu0 %v115
    %140 = vmatpush.bf16.msra.mxu0 %v113
    %141 = vmatmul.bf16.gmra.mxu0 %v131
    %v142 = vpop.f32.mrf.mxu0
    %v143 = vadd.f32 0.0, %v142
    %v144 = vpop.f32.mrf.mxu0
    %v145 = vadd.f32 0.0, %v144
    %146 = vdwg.mxu0
    %147 = vmatpush.bf16.msra.mxu0 0
    %148 = vmatpush.bf16.msra.mxu0 0
    %149 = vmatpush.bf16.msra.mxu0 0
    %150 = vmatpush.bf16.msra.mxu0 0
    %151 = vmatpush.bf16.msra.mxu0 %v120
    %152 = vmatpush.bf16.msra.mxu0 %v118
    %153 = vmatpush.bf16.msra.mxu0 %v116
    %154 = vmatpush.bf16.msra.mxu0 %v114
    %155 = vmatmul.bf16.gmra.mxu0 %v131
    %v156 = vpop.f32.mrf.mxu0
    %v157 = vadd.f32 0.0, %v156
    %v158 = vpop.f32.mrf.mxu0
    %v159 = vadd.f32 0.0, %v158
    %160 = vdwg.mxu0
    %v161 = vadd.f32 %v70, %v143
    %v162 = vadd.f32 %v71, %v157
    %v163 = vadd.f32 %v72, %v145
    %v164 = vadd.f32 %v73, %v159
    %165 = vst [vmem:[#allocation2] sm:$0xff] %v161
    %166 = vst.msk [vmem:[#allocation2 + $0x8] sm:$0xff] %vm129, %v162
    %167 = vst [vmem:[#allocation2 + $0x10] sm:$0xff] %v163
    %168 = vst.msk [vmem:[#allocation2 + $0x18] sm:$0xff] %vm129, %v164
    // Predicated region
    $region30: #{tpu_custom_call.1} parent=1 // pred_check
      %p169 = pneg %p61
    $region31: #{tpu_custom_call.1} parent=1 // pred_check_branch
      %171 = sbr.rel (%p169) target = $region33
    $region32: #{tpu_custom_call.1} parent=1 // pred_region
      %v172 = vld [vmem:[#allocation2] sm:$0xff]
      %v173 = vld [vmem:[#allocation2 + $0x8] sm:$0xff]
      %v174 = vld [vmem:[#allocation2 + $0x10] sm:$0xff]
      %v175 = vld [vmem:[#allocation2 + $0x18] sm:$0xff]
      %v176 = vld [vmem:[#allocation8] sm:$0x3]
      %v178 = vperm.slane %v176, 0
      %v179 = vperm.slane %v176, 1
      %v182 = vadd.f32 %v172, %v178
      %v183 = vadd.f32 %v173, %v179
      %v184 = vadd.f32 %v174, %v178
      %v185 = vadd.f32 %v175, %v179
      %v186 = vpack.c.bf16 %v183, %v182
      %v187 = vpack.c.bf16 %v185, %v184
      %vm188 = vcmask 1043456
      %vm189 = vcmask 523268
      %vm190 = vmor %vm189, %vm188
      %191 = vst.msk [vmem:[#allocation9] sm:$0xff] %vm190, %v186
      %192 = vst.msk [vmem:[#allocation9 + $0x8] sm:$0xff] %vm190, %v187
    $region33: #{tpu_custom_call.1} parent=1 // pred_fallthru
      _
    // Predicated region
    $region34: #{tpu_custom_call.1} parent=1 // pred_check
      _
    $region35: #{tpu_custom_call.1} parent=1 // pred_check_branch
      %194 = sbr.rel (0) target = $region37
    $region36: #{tpu_custom_call.1} parent=1 // pred_region
      %196 = vsyncadd [#allocation5], 0
      %s197 = sshll.u32 [#allocation9], 4
      %s198 = int_to_ptr.vmem [resolvable:$true] %s197
      %s199 = sshll.u32 %s3, 4
      %s200 = int_to_ptr.hbm [resolvable:$true] %s199
      %205 = dma.vmem_to_hbm [thread:$0]  %s198, 256, %s200, [#allocation5], 128, 128, 8
    $region37: #{tpu_custom_call.1} parent=1 // pred_fallthru
      _
    // Predicated region
    $region38: #{tpu_custom_call.1} parent=1 // pred_check
      _
    $region39: #{tpu_custom_call.1} parent=1 // pred_check_branch
      %207 = sbr.rel (0) target = $region41
    $region40: #{tpu_custom_call.1} parent=1 // pred_region
      %209 = dma.done [#allocation5], 256
    $region41: #{tpu_custom_call.1} parent=1 // pred_fallthru
      _
    %210 = vsyncpa [#allocation4], 1
    %211 = vsyncpa [#allocation7], 1
    %212 = vsyncpa [#allocation5], 1

</llo_original>
